<compile_context>
chip_gen: v6e
topology: v6e:2x2x1
jax: 0.10.0
libtpu: 0.0.40
codegen_flags: <defaults>
</compile_context>

<pallas_src>
import functools

import jax
import jax.numpy as jnp
from jax import lax
from jax.experimental import pallas as pl
from jax.experimental.pallas import tpu as pltpu

_LANES = 128
_SUM_BLOCK_ROWS = 4096     # 4096 x 128 f32 = 2 MiB streamed per input per step
_ELEM_BLOCK_ROWS = 2048    # smaller: this path also streams the output
_VMEM_LIMIT_BYTES = 32 * 1024 * 1024
# exp(-120) underflows to 0 in f32, so bce == 0 *exactly* on pad elements and
# the focal contribution is exactly 0 for any gamma >= 0 (pt == 1).
_PAD_LOGIT = 120.0
_PAD_TARGET = 1.0


def _cdiv(a, b):
    return -(-a // b)


def _num_tensorcores() -> int:
    """Best-effort TensorCores-per-chip probe (v7x has 2). Defaults to 1."""
    try:
        info = pltpu.get_tpu_info()
    except Exception:
        return 1
    for name in ("num_cores", "num_tensorcores", "tensorcore_count",
                 "num_cores_per_chip", "cores_per_chip", "core_count"):
        v = getattr(info, name, None)
        if v is None:
            continue
        try:
            v = int(v)
        except (TypeError, ValueError):
            continue
        if 1 <= v <= 16:
            return v
    # Fallback heuristic: only the v7x family ("7") has 2 TCs per chip.
    if "7" in str(getattr(info, "chip_version", "")):
        return 2
    return 1


def _focal_modulation(d, gamma):
    """(1 - pt) ** gamma via a multiply chain for small integer gamma."""
    g = float(gamma)
    if g == int(g) and 0 <= int(g) <= 8:
        gi = int(g)
        if gi == 0:
            return jnp.ones_like(d)
        out = d
        for _ in range(gi - 1):
            out = out * d
        return out
    return d ** g


def _focal_value(x_ref, t_ref, *, gamma, hard_targets, alpha=None):
    """Per-element focal loss for the current block (f32)."""
    x = x_ref[...].astype(jnp.float32)
    t = t_ref[...].astype(jnp.float32)
    # binary_cross_entropy_with_logits (reduction='none'), stable form:
    #   bce = max(x, 0) - x*t + log1p(exp(-|x|))
    e = jnp.exp(-jnp.abs(x))                              # EUP
    bce = jnp.maximum(x, 0.0) - x * t + jnp.log1p(e)      # EUP (log1p) + VPU
    if hard_targets:
        # pt = sigmoid((2t-1) x); exact for t in {0, 1}.  Reuses e = exp(-|x|)
        # (|(2t-1)x| == |x|): 2 heavy EUP ops + 1 cheap vrcp per element
        # instead of 3 heavy EUP ops.
        z_nonneg = (x >= 0.0) == (t >= 0.5)               # sign of (2t-1) x
        pt = jnp.where(z_nonneg, 1.0, e) * pl.reciprocal(1.0 + e, approx=True)
    else:
        pt = jnp.exp(-bce)                                # exact PyTorch path
    out = _focal_modulation(1.0 - pt, gamma) * bce
    if alpha is not None and float(alpha) != 1.0:
        out = out * jnp.float32(alpha)
    return out


def _focal_sum_kernel(x_ref, t_ref, o_ref, acc_ref, *, gamma, hard_targets,
                      rows_valid, steps, block_rows):
    """Accumulates one block's focal loss into an (8, 128) VMEM accumulator."""
    c = pl.program_id(0)
    i = pl.program_id(1)

    @pl.when(i == 0)
    def _():
        acc_ref[...] = jnp.zeros_like(acc_ref)

    val = _focal_value(x_ref, t_ref, gamma=gamma, hard_targets=hard_targets)
    row_start = (c * steps + i) * block_rows
    is_full = row_start + block_rows <= rows_valid

    @pl.when(is_full)
    def _():
        # Fold (block_rows, 128) -> (8, 128) with pure VPU adds; the reshape
        # follows the native (8, 128) tiling exactly.
        acc_ref[...] += val.reshape(-1, 8, val.shape[-1]).sum(axis=0)

    @pl.when(jnp.logical_not(is_full))
    def _():
        # Final (partial / clamped) block: rows past the valid extent hold
        # undefined data -- mask them out before accumulating.
        row = row_start + lax.broadcasted_iota(jnp.int32, val.shape, 0)
        masked = jnp.where(row < rows_valid, val, 0.0)
        acc_ref[...] += masked.reshape(-1, 8, masked.shape[-1]).sum(axis=0)

    @pl.when(i == pl.num_programs(1) - 1)
    def _():
        o_ref[...] = acc_ref[...][None, :, :]


def _focal_elem_kernel(x_ref, t_ref, o_ref, *, alpha, gamma, hard_targets):
    """Per-element focal loss (reduction=None)."""
    val = _focal_value(x_ref, t_ref, gamma=gamma, hard_targets=hard_targets,
                       alpha=alpha)
    o_ref[...] = val.astype(o_ref.dtype)


def focal_loss(inputs, targets, alpha=1.0, gamma=2.0, reduction="mean",
               hard_targets=False):
    """JAX/Pallas equivalent of FocalLoss.forward (inputs are logits).

    hard_targets=True enables the cheaper pt = sigmoid((2t-1)x) path (exact
    only for {0,1} targets); the default keeps the exact PyTorch formulation.
    """
    assert inputs.shape == targets.shape
    orig_shape = inputs.shape
    n = int(inputs.size)

    out_dtype = (inputs.dtype if jnp.issubdtype(inputs.dtype, jnp.floating)
                 else jnp.float32)

    if n == 0:
        if reduction == "mean":
            return jnp.float32(jnp.nan)
        if reduction == "sum":
            return jnp.float32(0.0)
        return jnp.zeros(orig_shape, dtype=out_dtype)

    x = inputs.reshape(-1)
    t = targets.reshape(-1)

    # Lane-dense slab view: (rows, 128).  The reshape is free; a real pad
    # (HBM copy) only happens when n % 128 != 0 or n < 1024.
    rows = max(_cdiv(n, _LANES), 8)
    pad = rows * _LANES - n
    if pad:
        x = jnp.pad(x, (0, pad), constant_values=_PAD_LOGIT)
        t = jnp.pad(t, (0, pad), constant_values=_PAD_TARGET)
    x2 = x.reshape(rows, _LANES)
    t2 = t.reshape(rows, _LANES)

    if reduction in ("mean", "sum"):
        block_rows = min(_SUM_BLOCK_ROWS, (rows // 8) * 8)
        total_blocks = _cdiv(rows, block_rows)

        # Split rows contiguously across TensorCores only when the chip has
        # more than one (v7x); single-core chips get one serial axis.
        num_cores = _num_tensorcores()
        splits = num_cores if (num_cores > 1 and total_blocks >= num_cores) else 1
        steps = _cdiv(total_blocks, splits)

        def in_map(c, i):
            # Clamp so the DMA never starts past the array; any over-hanging
            # duplicate block is fully masked out inside the kernel.
            return (jnp.minimum(c * steps + i, total_blocks - 1), 0)

        kern = functools.partial(
            _focal_sum_kernel, gamma=float(gamma), hard_targets=hard_targets,
            rows_valid=rows, steps=steps, block_rows=block_rows)

        dims = ((pltpu.CORE_PARALLEL if splits > 1 else "arbitrary"),
                "arbitrary")

        partials = pl.pallas_call(
            kern,
            out_shape=jax.ShapeDtypeStruct((splits, 8, _LANES), jnp.float32),
            grid_spec=pltpu.PrefetchScalarGridSpec(
                num_scalar_prefetch=0,
                grid=(splits, steps),
                in_specs=[pl.BlockSpec((block_rows, _LANES), in_map),
                          pl.BlockSpec((block_rows, _LANES), in_map)],
                out_specs=pl.BlockSpec((1, 8, _LANES), lambda c, i: (c, 0, 0)),
                scratch_shapes=[pltpu.VMEM((8, _LANES), jnp.float32)],
            ),
            compiler_params=pltpu.CompilerParams(
                dimension_semantics=dims,
                vmem_limit_bytes=_VMEM_LIMIT_BYTES),
        )(x2, t2)

        total = jnp.sum(partials) * jnp.float32(alpha)
        if reduction == "mean":
            total = total / jnp.float32(n)
        return total

    # reduction is None (or anything else -> no reduction, like the module).
    block_rows = min(_ELEM_BLOCK_ROWS, (rows // 8) * 8)
    blocks = _cdiv(rows, block_rows)
    kern = functools.partial(
        _focal_elem_kernel, alpha=float(alpha), gamma=float(gamma),
        hard_targets=hard_targets)
    out = pl.pallas_call(
        kern,
        out_shape=jax.ShapeDtypeStruct((rows, _LANES), out_dtype),
        grid_spec=pltpu.PrefetchScalarGridSpec(
            num_scalar_prefetch=0,
            grid=(blocks,),
            in_specs=[pl.BlockSpec((block_rows, _LANES), lambda i: (i, 0)),
                      pl.BlockSpec((block_rows, _LANES), lambda i: (i, 0))],
            out_specs=pl.BlockSpec((block_rows, _LANES), lambda i: (i, 0)),
        ),
        compiler_params=pltpu.CompilerParams(
            dimension_semantics=("parallel",),
            vmem_limit_bytes=_VMEM_LIMIT_BYTES),
    )(x2, t2)
    if pad:
        # Only when n % 128 != 0 (rare): one output-sized slice copy.
        return out.reshape(-1)[:n].reshape(orig_shape)
    return out.reshape(orig_shape)


def _reference(inputs, targets, alpha=1.0, gamma=2.0, reduction="mean"):
    x = inputs.astype(jnp.float32)
    t = targets.astype(jnp.float32)
    bce = jnp.maximum(x, 0.0) - x * t + jnp.log1p(jnp.exp(-jnp.abs(x)))
    pt = jnp.exp(-bce)
    fl = alpha * (1.0 - pt) ** gamma * bce
    if reduction == "mean":
        return fl.mean()
    if reduction == "sum":
        return fl.sum()
    return fl


if __name__ == "__main__":
    key = jax.random.PRNGKey(0)
    k1, k2, k3, k4 = jax.random.split(key, 4)

    # Small NCHW-like shape: batch=2, channels=4, spatial=16x16 (logits).
    shape = (2, 4, 16, 16)
    logits = jax.random.normal(k1, shape, dtype=jnp.float32) * 2.0
    targets = (jax.random.uniform(k2, shape) > 0.7).astype(jnp.float32)

    out_mean = focal_loss(logits, targets, alpha=1.0, gamma=2.0, reduction="mean")
    jax.block_until_ready(out_mean)
    ref_mean = _reference(logits, targets, 1.0, 2.0, "mean")
    assert jnp.allclose(out_mean, ref_mean, rtol=1e-5, atol=1e-6), (out_mean, ref_mean)

    out_sum = focal_loss(logits, targets, reduction="sum")
    jax.block_until_ready(out_sum)
    assert jnp.allclose(out_sum, _reference(logits, targets, reduction="sum"),
                        rtol=1e-5, atol=1e-5)

    out_none = focal_loss(logits, targets, reduction=None)
    jax.block_until_ready(out_none)
    assert out_none.shape == shape
    assert out_none.dtype == logits.dtype
    assert jnp.allclose(out_none, _reference(logits, targets, reduction=None),
                        rtol=1e-5, atol=1e-6)

    # Non-default hyperparameters (non-integer gamma exercises the pow path).
    out_a = focal_loss(logits, targets, alpha=0.25, gamma=1.5, reduction="mean")
    jax.block_until_ready(out_a)
    assert jnp.allclose(out_a, _reference(logits, targets, 0.25, 1.5, "mean"),
                        rtol=1e-5, atol=1e-6)

    # Cheaper hard-target path (one fewer transcendental per element); looser
    # tolerance because of the approximate EUP reciprocal.
    out_h = focal_loss(logits, targets, reduction="mean", hard_targets=True)
    jax.block_until_ready(out_h)
    assert jnp.allclose(out_h, ref_mean, rtol=3e-2, atol=1e-4), (out_h, ref_mean)

    # Ragged size (n % 128 != 0 and rows % block_rows != 0): exercises the
    # in-kernel masking of the final partial block and the tiny lane pad.
    rshape = (7, 167)
    rlogits = jax.random.normal(k3, rshape, dtype=jnp.float32)
    rtargets = (jax.random.uniform(k4, rshape) > 0.5).astype(jnp.float32)
    rm = focal_loss(rlogits, rtargets, reduction="mean")
    jax.block_until_ready(rm)
    assert jnp.allclose(rm, _reference(rlogits, rtargets, reduction="mean"),
                        rtol=1e-5, atol=1e-6)
    rn = focal_loss(rlogits, rtargets, reduction=None)
    jax.block_until_ready(rn)
    assert rn.shape == rshape
    assert jnp.allclose(rn, _reference(rlogits, rtargets, reduction=None),
                        rtol=1e-5, atol=1e-6)

    print("KERNEL_OK")
</pallas_src>

<mosaic_0001>
module attributes {stable_mosaic.version = 11 : i64} {
  func.func @_focal_sum_kernel(%arg0: i32, %arg1: i32, %arg2: memref<16x128xf32, #tpu.memory_space<vmem>>, %arg3: memref<16x128xf32, #tpu.memory_space<vmem>>, %arg4: memref<1x8x128xf32, #tpu.memory_space<vmem>>, %arg5: memref<8x128xf32, #tpu.memory_space<vmem>>) attributes {dimension_semantics = [#tpu.dimension_semantics<arbitrary>, #tpu.dimension_semantics<arbitrary>], iteration_bounds = array<i64: 1, 1>, scalar_prefetch = 0 : i64, scratch_operands = 1 : i64, tpu.core_type = #tpu.core_type<tc>, window_params = [{transform_indices = @transform_0, window_bounds = array<i64: 16, 128>}, {transform_indices = @transform_1, window_bounds = array<i64: 16, 128>}, {transform_indices = @transform_2, window_bounds = array<i64: 1, 8, 128>}]} {
    %c0_i32 = arith.constant 0 : i32
    %0 = arith.cmpi eq, %arg1, %c0_i32 : i32
    %1 = arith.extui %0 : i1 to i32
    %c0_i32_0 = arith.constant 0 : i32
    %2 = arith.cmpi ne, %1, %c0_i32_0 : i32
    scf.if %2 {
      %cst_13 = arith.constant 0.000000e+00 : f32
      %35 = vector.broadcast %cst_13 : f32 to vector<8x128xf32>
      %c0_14 = arith.constant 0 : index
      %c0_15 = arith.constant 0 : index
      %36 = vector.load %arg5[%c0_14, %c0_15] : memref<8x128xf32, #tpu.memory_space<vmem>>, vector<8x128xf32>
      tpu.vector_store %arg5[%c0_14, %c0_15], %35 {strides = array<i32>} : memref<8x128xf32, #tpu.memory_space<vmem>>, vector<8x128xf32>,
    } else {
    }
    %c0 = arith.constant 0 : index
    %c0_1 = arith.constant 0 : index
    %3 = vector.load %arg2[%c0, %c0_1] : memref<16x128xf32, #tpu.memory_space<vmem>>, vector<16x128xf32>
    %c0_2 = arith.constant 0 : index
    %c0_3 = arith.constant 0 : index
    %4 = vector.load %arg3[%c0_2, %c0_3] : memref<16x128xf32, #tpu.memory_space<vmem>>, vector<16x128xf32>
    %5 = math.absf %3 : vector<16x128xf32>
    %cst = arith.constant 0.000000e+00 : f32
    %6 = vector.broadcast %cst : f32 to vector<16x128xf32>
    %7 = arith.subf %6, %5 : vector<16x128xf32>
    %8 = math.exp %7 : vector<16x128xf32>
    %cst_4 = arith.constant 0.000000e+00 : f32
    %9 = vector.broadcast %cst_4 : f32 to vector<16x128xf32>
    %10 = arith.maximumf %3, %9 : vector<16x128xf32>
    %11 = arith.mulf %3, %4 : vector<16x128xf32>
    %12 = arith.subf %10, %11 : vector<16x128xf32>
    %13 = math.log1p %8 : vector<16x128xf32>
    %14 = arith.addf %12, %13 : vector<16x128xf32>
    %cst_5 = arith.constant 0.000000e+00 : f32
    %15 = vector.broadcast %cst_5 : f32 to vector<16x128xf32>
    %16 = arith.subf %15, %14 : vector<16x128xf32>
    %17 = math.exp %16 : vector<16x128xf32>
    %cst_6 = arith.constant 1.000000e+00 : f32
    %18 = vector.broadcast %cst_6 : f32 to vector<16x128xf32>
    %19 = arith.subf %18, %17 : vector<16x128xf32>
    %20 = arith.mulf %19, %19 : vector<16x128xf32>
    %21 = arith.mulf %20, %14 : vector<16x128xf32>
    %c1_i32 = arith.constant 1 : i32
    %22 = arith.muli %arg0, %c1_i32 : i32
    %23 = arith.addi %22, %arg1 : i32
    %c16_i32 = arith.constant 16 : i32
    %24 = arith.muli %23, %c16_i32 : i32
    %c16_i32_7 = arith.constant 16 : i32
    %25 = arith.addi %24, %c16_i32_7 : i32
    %c16_i32_8 = arith.constant 16 : i32
    %26 = arith.cmpi sle, %25, %c16_i32_8 : i32
    %27 = arith.extui %26 : i1 to i32
    %c0_i32_9 = arith.constant 0 : i32
    %28 = arith.cmpi ne, %27, %c0_i32_9 : i32
    scf.if %28 {
      %c0_13 = arith.constant 0 : index
      %c0_14 = arith.constant 0 : index
      %35 = vector.load %arg5[%c0_13, %c0_14] : memref<8x128xf32, #tpu.memory_space<vmem>>, vector<8x128xf32>
      %36 = vector.shape_cast %21 : vector<16x128xf32> to vector<2x8x128xf32>
      %cst_15 = arith.constant dense<0.000000e+00> : vector<8x128xf32>
      %37 = vector.multi_reduction <add>, %36, %cst_15 [0] : vector<2x8x128xf32> to vector<8x128xf32>
      %38 = arith.addf %35, %37 : vector<8x128xf32>
      %c0_16 = arith.constant 0 : index
      %c0_17 = arith.constant 0 : index
      %39 = vector.load %arg5[%c0_16, %c0_17] : memref<8x128xf32, #tpu.memory_space<vmem>>, vector<8x128xf32>
      tpu.vector_store %arg5[%c0_16, %c0_17], %38 {strides = array<i32>} : memref<8x128xf32, #tpu.memory_space<vmem>>, vector<8x128xf32>,
    } else {
    }
    %true = arith.constant true
    %29 = arith.xori %26, %true : i1
    %30 = arith.extui %29 : i1 to i32
    %c0_i32_10 = arith.constant 0 : i32
    %31 = arith.cmpi ne, %30, %c0_i32_10 : i32
    scf.if %31 {
      %35 = tpu.iota {dimensions = array<i32: 0>} : vector<16x128xi32>
      %36 = vector.broadcast %24 : i32 to vector<16x128xi32>
      %37 = arith.addi %36, %35 : vector<16x128xi32>
      %c16_i32_13 = arith.constant 16 : i32
      %38 = vector.broadcast %c16_i32_13 : i32 to vector<16x128xi32>
      %39 = arith.cmpi slt, %37, %38 : vector<16x128xi32>
      %cst_14 = arith.constant 0.000000e+00 : f32
      %40 = vector.broadcast %cst_14 : f32 to vector<16x128xf32>
      %41 = arith.select %39, %21, %40 : vector<16x128xi1>, vector<16x128xf32>
      %c0_15 = arith.constant 0 : index
      %c0_16 = arith.constant 0 : index
      %42 = vector.load %arg5[%c0_15, %c0_16] : memref<8x128xf32, #tpu.memory_space<vmem>>, vector<8x128xf32>
      %43 = vector.shape_cast %41 : vector<16x128xf32> to vector<2x8x128xf32>
      %cst_17 = arith.constant dense<0.000000e+00> : vector<8x128xf32>
      %44 = vector.multi_reduction <add>, %43, %cst_17 [0] : vector<2x8x128xf32> to vector<8x128xf32>
      %45 = arith.addf %42, %44 : vector<8x128xf32>
      %c0_18 = arith.constant 0 : index
      %c0_19 = arith.constant 0 : index
      %46 = vector.load %arg5[%c0_18, %c0_19] : memref<8x128xf32, #tpu.memory_space<vmem>>, vector<8x128xf32>
      tpu.vector_store %arg5[%c0_18, %c0_19], %45 {strides = array<i32>} : memref<8x128xf32, #tpu.memory_space<vmem>>, vector<8x128xf32>,
    } else {
    }
    %c0_i32_11 = arith.constant 0 : i32
    %32 = arith.cmpi eq, %arg1, %c0_i32_11 : i32
    %33 = arith.extui %32 : i1 to i32
    %c0_i32_12 = arith.constant 0 : i32
    %34 = arith.cmpi ne, %33, %c0_i32_12 : i32
    scf.if %34 {
      %c0_13 = arith.constant 0 : index
      %c0_14 = arith.constant 0 : index
      %35 = vector.load %arg5[%c0_13, %c0_14] : memref<8x128xf32, #tpu.memory_space<vmem>>, vector<8x128xf32>
      %36 = vector.shape_cast %35 : vector<8x128xf32> to vector<1x8x128xf32>
      %c0_15 = arith.constant 0 : index
      %c0_16 = arith.constant 0 : index
      %c0_17 = arith.constant 0 : index
      %37 = vector.load %arg4[%c0_15, %c0_16, %c0_17] : memref<1x8x128xf32, #tpu.memory_space<vmem>>, vector<1x8x128xf32>
      tpu.vector_store %arg4[%c0_15, %c0_16, %c0_17], %36 {strides = array<i32>} : memref<1x8x128xf32, #tpu.memory_space<vmem>>, vector<1x8x128xf32>,
    } else {
    }
    return
  }
  func.func @transform_0(%arg0: i32, %arg1: i32) -> (i32, i32) {
    %c1_i32 = arith.constant 1 : i32
    %0 = arith.muli %arg0, %c1_i32 : i32
    %1 = arith.addi %0, %arg1 : i32
    %c0_i32 = arith.constant 0 : i32
    %2 = arith.minsi %1, %c0_i32 : i32
    %c0_i32_0 = arith.constant 0 : i32
    %c0_i32_1 = arith.constant 0 : i32
    return %2, %c0_i32_0 : i32, i32
  }
  func.func @transform_1(%arg0: i32, %arg1: i32) -> (i32, i32) {
    %c1_i32 = arith.constant 1 : i32
    %0 = arith.muli %arg0, %c1_i32 : i32
    %1 = arith.addi %0, %arg1 : i32
    %c0_i32 = arith.constant 0 : i32
    %2 = arith.minsi %1, %c0_i32 : i32
    %c0_i32_0 = arith.constant 0 : i32
    %c0_i32_1 = arith.constant 0 : i32
    return %2, %c0_i32_0 : i32, i32
  }
  func.func @transform_2(%arg0: i32, %arg1: i32) -> (i32, i32, i32) {
    %c0_i32 = arith.constant 0 : i32
    %c0_i32_0 = arith.constant 0 : i32
    %c0_i32_1 = arith.constant 0 : i32
    return %arg0, %c0_i32, %c0_i32_0 : i32, i32, i32
  }
}

</mosaic_0001>

<llo_original>
// kernel: tpu_custom_call.1
$region0: #{tpu_custom_call.1}
  #allocation0 [shape = 'u32[]', space=smem, size = 0x4, offset = 0x4, fixed_abs, tag = 'smem constant byte address 0x4 - core index']
  #allocation1 [shape = 'u32[144,128]{1,0:T(1,128)}', space=vmem, size = 0x12000, scoped, tag = 'internal scratch']
  #allocation2 [shape = 'f32[8,128]{1,0:T(8,128)}', space=vmem, size = 0x1000, scoped, tag = 'scratch operand']
  %s0 = inlined_call_operand.hbm [shape: f32[16,128], index: 0, kind: input, shape index: {}]
  %s1 = inlined_call_operand.hbm [shape: f32[16,128], index: 1, kind: input, shape index: {}]
  %s2 = inlined_call_operand.hbm [shape: f32[1,8,128], index: 2, kind: output, shape index: {}]
  %s3 = sld [smem:[#allocation0]]
  $region42: #{tpu_custom_call.1} parent=0
    _
  %s5 = ssub.s32 1, %s3
  %s6 = scalar_select 0, %s5, %s3
  $region1: #{tpu_custom_call.1} parent=0
    #allocation3 [shape = 'u8[8192]{0}', space=vmem, size = 0x2000, scoped, tag = 'input window, operand 0, single buffered']
    #allocation4 [shape = 's32[1]{0}', space=sflag, size = 0x4, scoped, tag = 'scoped memory for tpu_custom_call.1']
    #allocation5 [shape = 's32[1]{0}', space=sflag, size = 0x4, scoped, tag = 'scoped memory for tpu_custom_call.1']
    #allocation6 [shape = 'u8[8192]{0}', space=vmem, size = 0x2000, scoped, tag = 'input window, operand 1, single buffered']
    #allocation7 [shape = 's32[1]{0}', space=sflag, size = 0x4, scoped, tag = 'scoped memory for tpu_custom_call.1']
    #allocation8 [shape = 'u8[4096]{0}', space=vmem, size = 0x1000, scoped, tag = 'output window, operand 0, single buffered']
    %7 = vsyncpa [#allocation4], 0
    %8 = vsyncpa [#allocation7], 0
    %9 = vsyncpa [#allocation5], 0
    // Predicated region
    $region2: #{tpu_custom_call.1} parent=1 // pred_check
      _
    $region3: #{tpu_custom_call.1} parent=1 // pred_check_branch
      %11 = sbr.rel (0) target = $region5
    $region4: #{tpu_custom_call.1} parent=1 // pred_region
      %s12 = sadd.s32 0, 0
      %p13 = scmp.lt.s32.totalorder %s12, 0
      %s14 = scalar_select %p13, %s12, 0
      %s15 = smul.u32 2, %s14
      %s17 = ssub.s32 256, 256
      %18 = vsyncadd [#allocation4], %s17
      %s19 = smul.addr %s15, 128
      %s20 = scalar_lea.hbm %s0, %s19
      %s21 = sshll.u32 [#allocation3], 4
      %s22 = int_to_ptr.vmem [resolvable:$true] %s21
      %27 = dma.hbm_to_vmem [thread:$0]  %s20, 256, %s22, [#allocation4], 128, 128, 8
    $region5: #{tpu_custom_call.1} parent=1 // pred_fallthru
      _
    // Predicated region
    $region6: #{tpu_custom_call.1} parent=1 // pred_check
      _
    $region7: #{tpu_custom_call.1} parent=1 // pred_check_branch
      %29 = sbr.rel (0) target = $region9
    $region8: #{tpu_custom_call.1} parent=1 // pred_region
      %s30 = sadd.s32 0, 0
      %p31 = scmp.lt.s32.totalorder %s30, 0
      %s32 = scalar_select %p31, %s30, 0
      %s33 = smul.u32 2, %s32
      %s35 = ssub.s32 256, 256
      %36 = vsyncadd [#allocation7], %s35
      %s37 = smul.addr %s33, 128
      %s38 = scalar_lea.hbm %s1, %s37
      %s39 = sshll.u32 [#allocation6], 4
      %s40 = int_to_ptr.vmem [resolvable:$true] %s39
      %45 = dma.hbm_to_vmem [thread:$0]  %s38, 256, %s40, [#allocation7], 128, 128, 8
    $region9: #{tpu_custom_call.1} parent=1 // pred_fallthru
      _
    // Predicated region
    $region10: #{tpu_custom_call.1} parent=1 // pred_check
      _
    $region11: #{tpu_custom_call.1} parent=1 // pred_check_branch
      %47 = sbr.rel (0) target = $region13
    $region12: #{tpu_custom_call.1} parent=1 // pred_region
      %48 = dma.done [#allocation4], 256
    $region13: #{tpu_custom_call.1} parent=1 // pred_fallthru
      _
    // Predicated region
    $region14: #{tpu_custom_call.1} parent=1 // pred_check
      _
    $region15: #{tpu_custom_call.1} parent=1 // pred_check_branch
      %50 = sbr.rel (0) target = $region17
    $region16: #{tpu_custom_call.1} parent=1 // pred_region
      %51 = dma.done [#allocation7], 256
    $region17: #{tpu_custom_call.1} parent=1 // pred_fallthru
      _
    %s52 = sadd.s32 0, 0
    %p53 = scmp.lt.s32.totalorder %s52, 0
    %s54 = scalar_select %p53, %s52, 0
    %s55 = smul.u32 2, %s54
    %s56 = sadd.s32 0, 0
    %p57 = scmp.lt.s32.totalorder %s56, 0
    %s58 = scalar_select %p57, %s56, 0
    %s59 = smul.u32 2, %s58
    %p60 = scmp.eq.s32.totalorder 0, 0
    // Predicated region
    $region18: #{tpu_custom_call.1} parent=1 // pred_check
      %p61 = pneg %p60
    $region19: #{tpu_custom_call.1} parent=1 // pred_check_branch
      %63 = sbr.rel (%p61) target = $region21
    $region20: #{tpu_custom_call.1} parent=1 // pred_region
      %64 = vst [vmem:[#allocation2] sm:$0xff] 0.0
    $region21: #{tpu_custom_call.1} parent=1 // pred_fallthru
      _
    %v65 = vld [vmem:[#allocation3] sm:$0xff]
    %v66 = vld [vmem:[#allocation3 + $0x8] sm:$0xff]
    %v67 = vld [vmem:[#allocation6] sm:$0xff]
    %v68 = vld [vmem:[#allocation6 + $0x8] sm:$0xff]
    %v69 = vand.u32 2147483647, %v65
    %v70 = vand.u32 2147483647, %v66
    %v71 = vsub.f32 0.0, %v69
    %v72 = vsub.f32 0.0, %v70
    %v73 = vmul.f32 %v71, 1.442695
    %v74 = vpow.pop %v73
    %v75 = vmul.f32 %v72, 1.442695
    %v76 = vpow.pop %v75
    %v77 = vmax.f32 %v65, 0.0
    %v78 = vmax.f32 %v66, 0.0
    %v79 = vmul.f32 %v65, %v67
    %v80 = vmul.f32 %v66, %v68
    %v81 = vsub.f32 %v77, %v79
    %v82 = vsub.f32 %v78, %v80
    %v83 = vadd.f32 %v74, 1.0
    %v84 = vlog2.pop %v83
    %v85 = vmul.f32 %v84, 0.6931472
    %v86 = vmul.f32 -0.5, %v74
    %v87 = vadd.f32 %v86, 1.0
    %v88 = vmul.f32 %v87, %v74
    %v89 = vand.u32 2147483647, %v74
    %vm90 = vcmp.lt.f32.partialorder %v89, 0.0004427343
    %v91 = vsel %vm90, %v88, %v85
    %v92 = vadd.f32 %v76, 1.0
    %v93 = vlog2.pop %v92
    %v94 = vmul.f32 %v93, 0.6931472
    %v95 = vmul.f32 -0.5, %v76
    %v96 = vadd.f32 %v95, 1.0
    %v97 = vmul.f32 %v96, %v76
    %v98 = vand.u32 2147483647, %v76
    %vm99 = vcmp.lt.f32.partialorder %v98, 0.0004427343
    %v100 = vsel %vm99, %v97, %v94
    %v101 = vadd.f32 %v81, %v91
    %v102 = vadd.f32 %v82, %v100
    %v103 = vsub.f32 0.0, %v101
    %v104 = vsub.f32 0.0, %v102
    %v105 = vmul.f32 %v103, 1.442695
    %v106 = vpow.pop %v105
    %v107 = vmul.f32 %v104, 1.442695
    %v108 = vpow.pop %v107
    %v109 = vsub.f32 1.0, %v106
    %v110 = vsub.f32 1.0, %v108
    %v111 = vmul.f32 %v109, %v109
    %v112 = vmul.f32 %v110, %v110
    %v113 = vmul.f32 %v111, %v101
    %v114 = vmul.f32 %v112, %v102
    %s115 = sadd.s32 0, 0
    %s116 = smul.u32 %s115, 16
    %s117 = sadd.s32 %s116, 16
    %p118 = scmp.le.s32.totalorder %s117, 16
    // Predicated region
    $region22: #{tpu_custom_call.1} parent=1 // pred_check
      %p119 = pneg %p118
    $region23: #{tpu_custom_call.1} parent=1 // pred_check_branch
      %121 = sbr.rel (%p119) target = $region25
    $region24: #{tpu_custom_call.1} parent=1 // pred_region
      %v122 = vld [vmem:[#allocation2] sm:$0xff]
      %v123 = vadd.f32 %v113, %v114
      %v124 = vadd.f32 %v122, %v123
      %125 = vst [vmem:[#allocation2] sm:$0xff] %v124
    $region25: #{tpu_custom_call.1} parent=1 // pred_fallthru
      _
    %p126 = scmp.gt.s32.totalorder %s117, 16
    // Predicated region
    $region26: #{tpu_custom_call.1} parent=1 // pred_check
      %p127 = pneg %p126
    $region27: #{tpu_custom_call.1} parent=1 // pred_check_branch
      %129 = sbr.rel (%p127) target = $region29
    $region28: #{tpu_custom_call.1} parent=1 // pred_region
      %v130 = vlaneseq
      %v131 = vshrl.u32 %v130, 7
      %v132 = vadd.s32 %v131, 8
      %v133 = vstv %s116
      %v134 = vadd.s32 %v133, %v131
      %v135 = vadd.s32 %v133, %v132
      %vm136 = vcmp.lt.s32.totalorder %v134, 16
      %vm137 = vcmp.lt.s32.totalorder %v135, 16
      %v138 = vsel %vm136, %v113, 0.0
      %v139 = vsel %vm137, %v114, 0.0
      %v140 = vld [vmem:[#allocation2] sm:$0xff]
      %v141 = vadd.f32 %v138, %v139
      %v142 = vadd.f32 %v140, %v141
      %143 = vst [vmem:[#allocation2] sm:$0xff] %v142
    $region29: #{tpu_custom_call.1} parent=1 // pred_fallthru
      _
    // Predicated region
    $region30: #{tpu_custom_call.1} parent=1 // pred_check
      %p144 = pneg %p60
    $region31: #{tpu_custom_call.1} parent=1 // pred_check_branch
      %146 = sbr.rel (%p144) target = $region33
    $region32: #{tpu_custom_call.1} parent=1 // pred_region
      %v147 = vld [vmem:[#allocation2] sm:$0xff]
      %148 = vst [vmem:[#allocation8] sm:$0xff] %v147
    $region33: #{tpu_custom_call.1} parent=1 // pred_fallthru
      _
    // Predicated region
    $region34: #{tpu_custom_call.1} parent=1 // pred_check
      _
    $region35: #{tpu_custom_call.1} parent=1 // pred_check_branch
      %150 = sbr.rel (0) target = $region37
    $region36: #{tpu_custom_call.1} parent=1 // pred_region
      %s152 = ssub.s32 128, 128
      %153 = vsyncadd [#allocation5], %s152
      %s155 = sshll.u32 [#allocation8], 4
      %s156 = int_to_ptr.vmem [resolvable:$true] %s155
      %158 = dma.vmem_to_hbm [thread:$0]  %s156, 128, %s2, [#allocation5]
    $region37: #{tpu_custom_call.1} parent=1 // pred_fallthru
      _
    // Predicated region
    $region38: #{tpu_custom_call.1} parent=1 // pred_check
      _
    $region39: #{tpu_custom_call.1} parent=1 // pred_check_branch
      %160 = sbr.rel (0) target = $region41
    $region40: #{tpu_custom_call.1} parent=1 // pred_region
      %161 = dma.done [#allocation5], 128
    $region41: #{tpu_custom_call.1} parent=1 // pred_fallthru
      _
    %162 = vsyncpa [#allocation4], 1
    %163 = vsyncpa [#allocation7], 1
    %164 = vsyncpa [#allocation5], 1

</llo_original>
